<compile_context>
chip_gen: v7x
topology: tpu7x:2x2x1
jax: 0.10.0
libtpu: 0.0.40
codegen_flags: <defaults>
</compile_context>

<pallas_src>
import functools

import jax
import jax.numpy as jnp
from jax.experimental import pallas as pl
from jax.experimental.pallas import tpu as pltpu

BN_EPS = 1e-5  # PyTorch BatchNorm2d default eps (eval-mode BN semantics)


def _cgns_kernel(x_ref, w_ref, wc_ref, b_ref, o_ref, *, mxu_dtype):
    """x_ref: (TB, C, Np); w_ref: (TB, 1, Np); wc_ref: (C, 2C); b_ref: (C, 1)."""
    TB, C, Np = x_ref.shape

    wc = wc_ref[...].astype(mxu_dtype)      # (C, 2C) folded conv weight [W0 | W1]
    w0 = wc[:, :C]                          # static lane slices (tiny)
    w1 = wc[:, C:]
    bias = b_ref[...]                       # (C, 1)

    def body(b, carry):
        x = x_ref[b]                                        # (C, Np)
        wrow = w_ref[b]                                     # (1, Np)

        wt = jnp.maximum(jnp.tanh(wrow), 0.0)               # relu(tanh(w))
        S = jnp.sum(wt, axis=-1, keepdims=True)             # (1, 1)
        d = jax.lax.rsqrt(wt * S + 1.0)                     # (1, Np)
        d2 = d * d
        u = d * wt

        # Per-channel lane reductions (replace the (C,N)@(N,N) matmuls).
        xw = jnp.sum(x * wt, axis=-1, keepdims=True)        # (C, 1) = x . wt
        xu = jnp.sum(x * u, axis=-1, keepdims=True)         # (C, 1) = x . u

        # Fused 1x1 conv, K = 2C, weight-stationary 2-D matmul on the MXU.
        rhs = jnp.concatenate([x, x * d2], axis=0).astype(mxu_dtype)     # (2C, Np)
        base = jnp.dot(wc, rhs, preferred_element_type=jnp.float32)      # (C, Np)

        # Rank-1 corrections pushed through the conv: tiny matvecs + FMAs.
        c0 = jnp.dot(w0, xw.astype(mxu_dtype),
                     preferred_element_type=jnp.float32)                 # (C, 1)
        c1 = jnp.dot(w1, xu.astype(mxu_dtype),
                     preferred_element_type=jnp.float32)                 # (C, 1)

        y = base + c0 * wt + c1 * u + bias                  # (C, Np)
        o_ref[b] = jnp.maximum(y, 0.0).astype(o_ref.dtype)
        return carry

    jax.lax.fori_loop(0, TB, body, 0, unroll=(TB <= 8))


def _round_up(n, m):
    return ((n + m - 1) // m) * m


def _vmem_capacity_bytes():
    try:
        return int(pltpu.get_tpu_info().vmem_capacity_bytes)
    except Exception:
        return 64 << 20  # conservative: v7x per-TensorCore VMEM


def _estimate_vmem(tb, C, Np):
    """Rough per-step VMEM footprint (bytes), f32, incl. double buffering."""
    f32 = 4
    x_tile = tb * C * Np * f32
    o_tile = tb * C * Np * f32
    w_tile = tb * 8 * Np * f32                 # (tb, 1, Np) -> sublane pad to 8
    weights = (C * 2 * C + C * 128) * f32      # wc + lane-padded bias
    # per-iteration live intermediates: x, x*d2, rhs(2C), base, y + small rows
    inter = (6 * C) * Np * f32 + 8 * 8 * Np * f32
    return 2 * (x_tile + o_tile + w_tile + weights) + inter


def _pick_tb(B, C, Np, vmem_cap):
    """Largest batch tile that fits ~45% of VMEM while keeping >=4 grid steps
    (>= 2 per TensorCore on dual-core chips) so DMA overlaps compute."""
    budget = int(0.45 * vmem_cap)
    divs = [d for d in range(1, B + 1) if B % d == 0]
    fits = [d for d in divs if _estimate_vmem(d, C, Np) <= budget] or [1]
    for min_steps in (4, 2, 1):
        pref = [d for d in fits if (B // d) >= min_steps]
        if pref:
            return max(pref)
    return 1


def cgns_block(x, w, params, *, mxu_dtype=jnp.float32):
    """x: (B, C, N, 1) float32 (NCHW, W==1);  w: (B, N) float32."""
    B, C, N, _ = x.shape
    conv_w, conv_b, gamma, beta, mu, var = params

    # Fold eval-mode BatchNorm into the 1x1 conv (wrapper-side, tiny).
    s = gamma * jax.lax.rsqrt(var + BN_EPS)                   # (C,)
    wc = conv_w * s[:, None]                                  # (C, 2C) folded weight
    bf = (s * (conv_b - mu) + beta).reshape(C, 1)             # (C, 1) folded bias

    # Lane-dense node axis: pad N up to a multiple of 128 (>= 128).  Padding
    # with zeros keeps the math inert (wt=0 on padded nodes, x=0), and the
    # padded columns are sliced off below.
    Np = max(128, _round_up(N, 128))
    x3 = x.reshape(B, C, N)
    w3 = w.reshape(B, 1, N)
    if Np != N:
        x3 = jnp.pad(x3, ((0, 0), (0, 0), (0, Np - N)))
        w3 = jnp.pad(w3, ((0, 0), (0, 0), (0, Np - N)))

    vmem_cap = _vmem_capacity_bytes()
    TB = _pick_tb(B, C, Np, vmem_cap)
    grid = (B // TB,)
    vmem_limit = int(min(0.8 * vmem_cap,
                         max(2 * _estimate_vmem(TB, C, Np), 32 << 20)))

    out = pl.pallas_call(
        functools.partial(_cgns_kernel, mxu_dtype=mxu_dtype),
        out_shape=jax.ShapeDtypeStruct((B, C, Np), jnp.float32),
        grid=grid,
        in_specs=[
            pl.BlockSpec((TB, C, Np), lambda i: (i, 0, 0)),   # x tile
            pl.BlockSpec((TB, 1, Np), lambda i: (i, 0, 0)),   # w tile
            pl.BlockSpec((C, 2 * C), lambda i: (0, 0)),       # folded conv weight
            pl.BlockSpec((C, 1), lambda i: (0, 0)),           # folded bias
        ],
        out_specs=pl.BlockSpec((TB, C, Np), lambda i: (i, 0, 0)),
        compiler_params=pltpu.CompilerParams(
            dimension_semantics=("parallel",),
            vmem_limit_bytes=vmem_limit,
        ),
    )(x3, w3, wc, bf)

    if Np != N:
        out = out[:, :, :N]
    return out.reshape(B, C, N, 1)


def cgns_block_ref(x, w, params):
    """Pure-JAX reference of the PyTorch forward (eval-mode BN)."""
    B, C, N, _ = x.shape
    conv_w, conv_b, gamma, beta, mu, var = params
    wt = jnp.maximum(jnp.tanh(w), 0.0)[..., None]               # (B, N, 1)
    A = wt @ jnp.transpose(wt, (0, 2, 1)) + jnp.eye(N)[None]    # (B, N, N)
    d = jax.lax.rsqrt(jnp.sum(A, axis=-1))                      # (B, N)
    L = d[:, :, None] * A * d[:, None, :]
    xs = x[..., 0]                                              # (B, C, N)
    out0 = jnp.einsum('bcn,bnm->bcm', xs, A)
    out1 = jnp.transpose(
        jnp.einsum('bnm,bmc->bnc', L, jnp.transpose(xs, (0, 2, 1))), (0, 2, 1))
    cat = jnp.concatenate([out0, out1], axis=1)                 # (B, 2C, N)
    y = jnp.einsum('oc,bcn->bon', conv_w, cat) + conv_b[None, :, None]
    y = (y - mu[None, :, None]) * jax.lax.rsqrt(var[None, :, None] + BN_EPS) \
        * gamma[None, :, None] + beta[None, :, None]
    return jnp.maximum(y, 0.0)[..., None]


def init_params(key, C):
    k1, k2 = jax.random.split(key)
    conv_w = 0.1 * jax.random.normal(k1, (C, 2 * C), dtype=jnp.float32)  # Conv2d 1x1 weight
    conv_b = 0.1 * jax.random.normal(k2, (C,), dtype=jnp.float32)        # Conv2d bias
    gamma = jnp.ones((C,), jnp.float32)   # BN weight
    beta = jnp.zeros((C,), jnp.float32)   # BN bias
    mu = jnp.zeros((C,), jnp.float32)     # BN running_mean
    var = jnp.ones((C,), jnp.float32)     # BN running_var
    return conv_w, conv_b, gamma, beta, mu, var


if __name__ == "__main__":
    B, C, N = 2, 4, 16
    key = jax.random.PRNGKey(0)
    kx, kw, kp = jax.random.split(key, 3)
    x = jax.random.normal(kx, (B, C, N, 1), dtype=jnp.float32)
    w = jax.random.normal(kw, (B, N), dtype=jnp.float32)
    params = init_params(kp, C)

    out = jax.block_until_ready(cgns_block(x, w, params))
    ref = cgns_block_ref(x, w, params)

    assert out.shape == (B, C, N, 1)
    max_err = float(jnp.max(jnp.abs(out - ref)))
    assert jnp.allclose(out, ref, rtol=1e-4, atol=1e-4), max_err
    print("KERNEL_OK")
</pallas_src>

<mosaic_0001>
module attributes {stable_mosaic.version = 11 : i64} {
  func.func @_cgns_kernel(%arg0: i32, %arg1: memref<1x4x128xf32, #tpu.memory_space<vmem>>, %arg2: memref<1x1x128xf32, #tpu.memory_space<vmem>>, %arg3: memref<4x8xf32, #tpu.memory_space<vmem>>, %arg4: memref<4x1xf32, #tpu.memory_space<vmem>>, %arg5: memref<1x4x128xf32, #tpu.memory_space<vmem>>) attributes {dimension_semantics = [#tpu.dimension_semantics<parallel>], iteration_bounds = array<i64: 2>, scalar_prefetch = 0 : i64, scratch_operands = 0 : i64, tpu.core_type = #tpu.core_type<tc>, window_params = [{transform_indices = @transform_0, window_bounds = array<i64: 1, 4, 128>}, {transform_indices = @transform_1, window_bounds = array<i64: 1, 1, 128>}, {pipeline_mode = #tpu.pipeline_mode<synchronous>, transform_indices = @transform_2, window_bounds = array<i64: 4, 8>}, {pipeline_mode = #tpu.pipeline_mode<synchronous>, transform_indices = @transform_3, window_bounds = array<i64: 4, 1>}, {transform_indices = @transform_4, window_bounds = array<i64: 1, 4, 128>}]} {
    %c0 = arith.constant 0 : index
    %c0_0 = arith.constant 0 : index
    %0 = vector.load %arg3[%c0, %c0_0] : memref<4x8xf32, #tpu.memory_space<vmem>>, vector<4x8xf32>
    %1 = vector.extract_strided_slice %0 {offsets = [0, 0], sizes = [4, 4], strides = [1, 1]} : vector<4x8xf32> to vector<4x4xf32>
    %2 = vector.extract_strided_slice %0 {offsets = [0, 4], sizes = [4, 4], strides = [1, 1]} : vector<4x8xf32> to vector<4x4xf32>
    %c0_1 = arith.constant 0 : index
    %c0_2 = arith.constant 0 : index
    %3 = vector.load %arg4[%c0_1, %c0_2] : memref<4x1xf32, #tpu.memory_space<vmem>>, vector<4x1xf32>
    %c0_i32 = arith.constant 0 : i32
    %4 = arith.index_cast %c0_i32 : i32 to index
    %c0_3 = arith.constant 0 : index
    %c0_4 = arith.constant 0 : index
    %5 = vector.load %arg1[%4, %c0_3, %c0_4] : memref<1x4x128xf32, #tpu.memory_space<vmem>>, vector<1x4x128xf32>
    %6 = vector.shape_cast %5 : vector<1x4x128xf32> to vector<4x128xf32>
    %7 = arith.index_cast %c0_i32 : i32 to index
    %c0_5 = arith.constant 0 : index
    %c0_6 = arith.constant 0 : index
    %8 = vector.load %arg2[%7, %c0_5, %c0_6] : memref<1x1x128xf32, #tpu.memory_space<vmem>>, vector<1x1x128xf32>
    %9 = vector.shape_cast %8 : vector<1x1x128xf32> to vector<1x128xf32>
    %10 = math.tanh %9 : vector<1x128xf32>
    %cst = arith.constant 0.000000e+00 : f32
    %11 = vector.broadcast %cst : f32 to vector<1x128xf32>
    %12 = arith.maximumf %10, %11 : vector<1x128xf32>
    %cst_7 = arith.constant dense<0.000000e+00> : vector<1xf32>
    %13 = vector.multi_reduction <add>, %12, %cst_7 [1] : vector<1x128xf32> to vector<1xf32>
    %14 = vector.shape_cast %13 : vector<1xf32> to vector<1x1xf32>
    %15 = vector.broadcast %14 : vector<1x1xf32> to vector<1x128xf32>
    %16 = arith.mulf %12, %15 : vector<1x128xf32>
    %cst_8 = arith.constant 1.000000e+00 : f32
    %17 = vector.broadcast %cst_8 : f32 to vector<1x128xf32>
    %18 = arith.addf %16, %17 : vector<1x128xf32>
    %19 = math.rsqrt %18 : vector<1x128xf32>
    %20 = arith.mulf %19, %19 : vector<1x128xf32>
    %21 = arith.mulf %19, %12 : vector<1x128xf32>
    %22 = vector.broadcast %12 : vector<1x128xf32> to vector<4x128xf32>
    %23 = arith.mulf %6, %22 : vector<4x128xf32>
    %cst_9 = arith.constant dense<0.000000e+00> : vector<4xf32>
    %24 = vector.multi_reduction <add>, %23, %cst_9 [1] : vector<4x128xf32> to vector<4xf32>
    %25 = vector.shape_cast %24 : vector<4xf32> to vector<4x1xf32>
    %26 = vector.broadcast %21 : vector<1x128xf32> to vector<4x128xf32>
    %27 = arith.mulf %6, %26 : vector<4x128xf32>
    %cst_10 = arith.constant dense<0.000000e+00> : vector<4xf32>
    %28 = vector.multi_reduction <add>, %27, %cst_10 [1] : vector<4x128xf32> to vector<4xf32>
    %29 = vector.shape_cast %28 : vector<4xf32> to vector<4x1xf32>
    %30 = vector.broadcast %20 : vector<1x128xf32> to vector<4x128xf32>
    %31 = arith.mulf %6, %30 : vector<4x128xf32>
    %32 = tpu.concatenate %6, %31 in 0 : vector<4x128xf32>, vector<4x128xf32> -> vector<8x128xf32>
    %cst_11 = arith.constant dense<0.000000e+00> : vector<4x128xf32>
    %33 = tpu.matmul %0, %32, %cst_11 {dimension_numbers = #tpu.dot_dimension_numbers<[1], [0], [0], [1], [0, 0, 1, 1], [], []>} : vector<4x8xf32>, vector<8x128xf32>, vector<4x128xf32> -> vector<4x128xf32>
    %cst_12 = arith.constant dense<0.000000e+00> : vector<4x1xf32>
    %34 = tpu.matmul %1, %25, %cst_12 {dimension_numbers = #tpu.dot_dimension_numbers<[1], [0], [0], [1], [0, 0, 1, 1], [], []>} : vector<4x4xf32>, vector<4x1xf32>, vector<4x1xf32> -> vector<4x1xf32>
    %cst_13 = arith.constant dense<0.000000e+00> : vector<4x1xf32>
    %35 = tpu.matmul %2, %29, %cst_13 {dimension_numbers = #tpu.dot_dimension_numbers<[1], [0], [0], [1], [0, 0, 1, 1], [], []>} : vector<4x4xf32>, vector<4x1xf32>, vector<4x1xf32> -> vector<4x1xf32>
    %36 = vector.broadcast %34 : vector<4x1xf32> to vector<4x128xf32>
    %37 = vector.broadcast %12 : vector<1x128xf32> to vector<4x128xf32>
    %38 = arith.mulf %36, %37 : vector<4x128xf32>
    %39 = arith.addf %33, %38 : vector<4x128xf32>
    %40 = vector.broadcast %35 : vector<4x1xf32> to vector<4x128xf32>
    %41 = vector.broadcast %21 : vector<1x128xf32> to vector<4x128xf32>
    %42 = arith.mulf %40, %41 : vector<4x128xf32>
    %43 = arith.addf %39, %42 : vector<4x128xf32>
    %44 = vector.broadcast %3 : vector<4x1xf32> to vector<4x128xf32>
    %45 = arith.addf %43, %44 : vector<4x128xf32>
    %cst_14 = arith.constant 0.000000e+00 : f32
    %46 = vector.broadcast %cst_14 : f32 to vector<4x128xf32>
    %47 = arith.maximumf %45, %46 : vector<4x128xf32>
    %48 = arith.index_cast %c0_i32 : i32 to index
    %c0_15 = arith.constant 0 : index
    %c0_16 = arith.constant 0 : index
    %49 = vector.load %arg5[%48, %c0_15, %c0_16] : memref<1x4x128xf32, #tpu.memory_space<vmem>>, vector<1x4x128xf32>
    %50 = vector.shape_cast %49 : vector<1x4x128xf32> to vector<4x128xf32>
    %51 = vector.shape_cast %47 : vector<4x128xf32> to vector<1x4x128xf32>
    tpu.vector_store %arg5[%48, %c0_15, %c0_16], %51 {strides = array<i32>} : memref<1x4x128xf32, #tpu.memory_space<vmem>>, vector<1x4x128xf32>,
    %c1_i32 = arith.constant 1 : i32
    return
  }
  func.func @transform_0(%arg0: i32) -> (i32, i32, i32) {
    %c0_i32 = arith.constant 0 : i32
    %c0_i32_0 = arith.constant 0 : i32
    %c0_i32_1 = arith.constant 0 : i32
    return %arg0, %c0_i32, %c0_i32_0 : i32, i32, i32
  }
  func.func @transform_1(%arg0: i32) -> (i32, i32, i32) {
    %c0_i32 = arith.constant 0 : i32
    %c0_i32_0 = arith.constant 0 : i32
    %c0_i32_1 = arith.constant 0 : i32
    return %arg0, %c0_i32, %c0_i32_0 : i32, i32, i32
  }
  func.func @transform_2(%arg0: i32) -> (i32, i32) {
    %c0_i32 = arith.constant 0 : i32
    %c0_i32_0 = arith.constant 0 : i32
    %c0_i32_1 = arith.constant 0 : i32
    return %c0_i32, %c0_i32_0 : i32, i32
  }
  func.func @transform_3(%arg0: i32) -> (i32, i32) {
    %c0_i32 = arith.constant 0 : i32
    %c0_i32_0 = arith.constant 0 : i32
    %c0_i32_1 = arith.constant 0 : i32
    return %c0_i32, %c0_i32_0 : i32, i32
  }
  func.func @transform_4(%arg0: i32) -> (i32, i32, i32) {
    %c0_i32 = arith.constant 0 : i32
    %c0_i32_0 = arith.constant 0 : i32
    %c0_i32_1 = arith.constant 0 : i32
    return %arg0, %c0_i32, %c0_i32_0 : i32, i32, i32
  }
}

</mosaic_0001>

<llo_original>
// kernel: tpu_custom_call.1
$region0: #{tpu_custom_call.1}
  #allocation0 [shape = 'u32[]', space=smem, size = 0x4, offset = 0x4, fixed_abs, tag = 'smem constant byte address 0x4 - core index']
  #allocation1 [shape = 'u32[144,128]{1,0:T(1,128)}', space=vmem, size = 0x12000, scoped, tag = 'internal scratch']
  %s0 = inlined_call_operand.hbm [shape: f32[2,4,128], index: 0, kind: input, shape index: {}]
  %s1 = inlined_call_operand.vmem [shape: f32[2,1,128], index: 1, kind: input, shape index: {}]
  %s2 = inlined_call_operand.vmem [shape: f32[4,8], index: 2, kind: input, shape index: {}]
  %s3 = inlined_call_operand.vmem [shape: f32[4,1], index: 3, kind: input, shape index: {}]
  %s4 = inlined_call_operand.hbm [shape: f32[2,4,128], index: 4, kind: output, shape index: {}]
  %s5 = sld [smem:[#allocation0]]
  $region53: #{tpu_custom_call.1} parent=0
    _
  %s7 = ssub.s32 1, %s5
  %s8 = scalar_select 0, %s7, %s5
  $region1: #{tpu_custom_call.1} parent=0
    #allocation2 [shape = 'u8[4096]{0}', space=vmem, size = 0x1000, scoped, tag = 'input window, operand 0']
    #allocation3 [shape = 's32[2]{0}', space=sflag, size = 0x8, scoped, tag = 'scoped memory for tpu_custom_call.1']
    #allocation4 [shape = 's32[2]{0}', space=sflag, size = 0x8, scoped, tag = 'scoped memory for tpu_custom_call.1']
    #allocation5 [shape = 'u8[4096]{0}', space=vmem, size = 0x1000, scoped, tag = 'output window, operand 0']
    %9 = vsyncpa [#allocation3], 0
    %s10 = scalar_lea.sflag [#allocation3], 1
    %11 = vsyncpa %s10, 0
    %12 = vsyncpa [#allocation4], 0
    %s13 = scalar_lea.sflag [#allocation4], 1
    %14 = vsyncpa %s13, 0
    loop: start=0, step=1, limit=4
    $region2: #{tpu_custom_call.1} parent=1 // loop_pre_header
      _
    $region3: #{tpu_custom_call.1} parent=1 // loop_header
      %s16 = sphi 0, %s20
      %p17 = scmp.ge.s32.totalorder %s16, 4
      %s26 = sphi 0, %s28
      %s29 = sphi 0, %s26
      %s30 = sphi 0, %s29
      %s46 = sphi 0, %s30
      %s52 = sphi 0, %s54
      %s55 = sphi 0, %s52
      %s56 = sphi 0, %s55
      %s72 = sphi 0, %s56
      %s76 = sphi 0, %s76
      %s78 = sphi 0, %s76
      %s79 = sphi 0, %s78
      %s93 = sphi 0, %s79
      %s97 = sphi 0, %s97
      %s99 = sphi 0, %s97
      %s100 = sphi 0, %s99
      %s114 = sphi 0, %s100
      %s120 = sphi 0, %s122
      %s123 = sphi 0, %s120
      %s124 = sphi 0, %s123
      %s140 = sphi 0, %s124
    $region4: #{tpu_custom_call.1} parent=1 // loop_header_branch
      %19 = sbr.rel (%p17) target = $region8
    $region5: #{tpu_custom_call.1} parent=1 // loop_body
      %s21 = ssub.s32 %s16, 1
      %s22 = ssub.s32 %s16, 2
      %s23 = sadd.s32 %s16, 1
      %s24 = ssub.s32 %s16, %s23
      %p25 = scmp.eq.s32.totalorder %s24, 0
      %s27 = sadd.s32 %s26, 1
      %s28 = scalar_select %p25, %s26, %s27
      %p31 = pneg %p25
      %p32 = scmp.eq.s32.totalorder %s16, 1
      %p33 = por %p31, %p32
      %p34 = scmp.ne.s32.totalorder %s26, %s29
      %p35 = scmp.eq.s32.totalorder %s16, 0
      %p36 = por %p34, %p35
      %p37 = scmp.ne.s32.totalorder %s26, %s29
      %p38 = scmp.eq.s32.totalorder %s21, 1
      %p39 = por %p37, %p38
      %p40 = scmp.ne.s32.totalorder %s29, %s30
      %p41 = scmp.eq.s32.totalorder %s21, 0
      %p42 = por %p40, %p41
      %p43 = scmp.ne.s32.totalorder %s29, %s30
      %p44 = scmp.eq.s32.totalorder %s22, 1
      %p45 = por %p43, %p44
      %p47 = scmp.ne.s32.totalorder %s30, %s46
      %p48 = scmp.eq.s32.totalorder %s22, 0
      %p49 = por %p47, %p48
      %s50 = ssub.s32 %s16, %s23
      %p51 = scmp.eq.s32.totalorder %s50, 0
      %s53 = sadd.s32 %s52, 1
      %s54 = scalar_select %p51, %s52, %s53
      %p57 = pneg %p51
      %p58 = scmp.eq.s32.totalorder %s16, 1
      %p59 = por %p57, %p58
      %p60 = scmp.ne.s32.totalorder %s52, %s55
      %p61 = scmp.eq.s32.totalorder %s16, 0
      %p62 = por %p60, %p61
      %p63 = scmp.ne.s32.totalorder %s52, %s55
      %p64 = scmp.eq.s32.totalorder %s21, 1
      %p65 = por %p63, %p64
      %p66 = scmp.ne.s32.totalorder %s55, %s56
      %p67 = scmp.eq.s32.totalorder %s21, 0
      %p68 = por %p66, %p67
      %p69 = scmp.ne.s32.totalorder %s55, %s56
      %p70 = scmp.eq.s32.totalorder %s22, 1
      %p71 = por %p69, %p70
      %p73 = scmp.ne.s32.totalorder %s56, %s72
      %p74 = scmp.eq.s32.totalorder %s22, 0
      %p75 = por %p73, %p74
      %s77 = sadd.s32 %s76, 1
      %p80 = scmp.eq.s32.totalorder %s16, 1
      %p81 = scmp.ne.s32.totalorder %s76, %s78
      %p82 = scmp.eq.s32.totalorder %s16, 0
      %p83 = por %p81, %p82
      %p84 = scmp.ne.s32.totalorder %s76, %s78
      %p85 = scmp.eq.s32.totalorder %s21, 1
      %p86 = por %p84, %p85
      %p87 = scmp.ne.s32.totalorder %s78, %s79
      %p88 = scmp.eq.s32.totalorder %s21, 0
      %p89 = por %p87, %p88
      %p90 = scmp.ne.s32.totalorder %s78, %s79
      %p91 = scmp.eq.s32.totalorder %s22, 1
      %p92 = por %p90, %p91
      %p94 = scmp.ne.s32.totalorder %s79, %s93
      %p95 = scmp.eq.s32.totalorder %s22, 0
      %p96 = por %p94, %p95
      %s98 = sadd.s32 %s97, 1
      %p101 = scmp.eq.s32.totalorder %s16, 1
      %p102 = scmp.ne.s32.totalorder %s97, %s99
      %p103 = scmp.eq.s32.totalorder %s16, 0
      %p104 = por %p102, %p103
      %p105 = scmp.ne.s32.totalorder %s97, %s99
      %p106 = scmp.eq.s32.totalorder %s21, 1
      %p107 = por %p105, %p106
      %p108 = scmp.ne.s32.totalorder %s99, %s100
      %p109 = scmp.eq.s32.totalorder %s21, 0
      %p110 = por %p108, %p109
      %p111 = scmp.ne.s32.totalorder %s99, %s100
      %p112 = scmp.eq.s32.totalorder %s22, 1
      %p113 = por %p111, %p112
      %p115 = scmp.ne.s32.totalorder %s100, %s114
      %p116 = scmp.eq.s32.totalorder %s22, 0
      %p117 = por %p115, %p116
      %s118 = ssub.s32 %s16, %s23
      %p119 = scmp.eq.s32.totalorder %s118, 0
      %s121 = sadd.s32 %s120, 1
      %s122 = scalar_select %p119, %s120, %s121
      %p125 = pneg %p119
      %p126 = scmp.eq.s32.totalorder %s16, 1
      %p127 = por %p125, %p126
      %p128 = scmp.ne.s32.totalorder %s120, %s123
      %p129 = scmp.eq.s32.totalorder %s16, 0
      %p130 = por %p128, %p129
      %p131 = scmp.ne.s32.totalorder %s120, %s123
      %p132 = scmp.eq.s32.totalorder %s21, 1
      %p133 = por %p131, %p132
      %p134 = scmp.ne.s32.totalorder %s123, %s124
      %p135 = scmp.eq.s32.totalorder %s21, 0
      %p136 = por %p134, %p135
      %p137 = scmp.ne.s32.totalorder %s123, %s124
      %p138 = scmp.eq.s32.totalorder %s22, 1
      %p139 = por %p137, %p138
      %p141 = scmp.ne.s32.totalorder %s124, %s140
      %p142 = scmp.eq.s32.totalorder %s22, 0
      %p143 = por %p141, %p142
      %p144 = scmp.le.s32.totalorder 1, %s16
      %p145 = scmp.lt.s32.totalorder %s16, 3
      %p146 = pnand %p144, %p145
      %p147 = pneg %p146
      // Predicated region
      $region9: #{tpu_custom_call.1} parent=5 // pred_check
        _
      $region10: #{tpu_custom_call.1} parent=5 // pred_check_branch
        %149 = sbr.rel (%p146) target = $region12
      $region11: #{tpu_custom_call.1} parent=5 // pred_region
        %s150 = ssub.s32 %s16, 1
        // Predicated region
        $region13: #{tpu_custom_call.1} parent=11 // pred_check
          %p151 = pneg %p89
        $region14: #{tpu_custom_call.1} parent=11 // pred_check_branch
          %153 = sbr.rel (%p151) target = $region16
        $region15: #{tpu_custom_call.1} parent=11 // pred_region
          _
        $region16: #{tpu_custom_call.1} parent=11 // pred_fallthru
          _
        // Predicated region
        $region17: #{tpu_custom_call.1} parent=11 // pred_check
          %p154 = pneg %p110
        $region18: #{tpu_custom_call.1} parent=11 // pred_check_branch
          %156 = sbr.rel (%p154) target = $region20
        $region19: #{tpu_custom_call.1} parent=11 // pred_region
          _
        $region20: #{tpu_custom_call.1} parent=11 // pred_fallthru
          _
      $region12: #{tpu_custom_call.1} parent=5 // pred_fallthru
        _
      %p157 = scmp.lt.s32.totalorder %s16, 2
      // Predicated region
      $region21: #{tpu_custom_call.1} parent=5 // pred_check
        %p158 = pneg %p157
      $region22: #{tpu_custom_call.1} parent=5 // pred_check_branch
        %160 = sbr.rel (%p158) target = $region24
      $region23: #{tpu_custom_call.1} parent=5 // pred_region
        // Predicated region
        $region25: #{tpu_custom_call.1} parent=23 // pred_check
          %p161 = pneg %p36
        $region26: #{tpu_custom_call.1} parent=23 // pred_check_branch
          %163 = sbr.rel (%p161) target = $region28
        $region27: #{tpu_custom_call.1} parent=23 // pred_region
          %s164 = sand.u32 %s26, 1
          %s165 = scalar_lea.sflag [#allocation3], %s164
          %s166 = sand.u32 %s26, 1
          %s167 = smul.addr %s166, 4
          %s168 = scalar_lea.vmem [#allocation2], %s167
          %s170 = ssub.s32 64, 64
          %171 = vsyncadd %s165, %s170
          %s172 = smul.addr %s16, 64
          %s173 = scalar_lea.hbm %s0, %s172
          %s175 = sshll.u32 %s168, 4
          %s176 = int_to_ptr.vmem [resolvable:$true] %s175
          %178 = dma.hbm_to_vmem [thread:$0]  %s173, 64, %s176, %s165
        $region28: #{tpu_custom_call.1} parent=23 // pred_fallthru
          _
        // Predicated region
        $region29: #{tpu_custom_call.1} parent=23 // pred_check
          %p179 = pneg %p62
        $region30: #{tpu_custom_call.1} parent=23 // pred_check_branch
          %181 = sbr.rel (%p179) target = $region32
        $region31: #{tpu_custom_call.1} parent=23 // pred_region
          %p182 = scmp.lt.s32.totalorder %s16, 1
          %s183 = scalar_select %p182, %s16, 1
          %s184 = scalar_lea.vmem %s1, %s183
        $region32: #{tpu_custom_call.1} parent=23 // pred_fallthru
          _
      $region24: #{tpu_custom_call.1} parent=5 // pred_fallthru
        _
      %p185 = scmp.le.s32.totalorder 1, %s16
      %p186 = scmp.lt.s32.totalorder %s16, 3
      %p187 = pnand %p185, %p186
      %p188 = pneg %p187
      // Predicated region
      $region33: #{tpu_custom_call.1} parent=5 // pred_check
        _
      $region34: #{tpu_custom_call.1} parent=5 // pred_check_branch
        %190 = sbr.rel (%p187) target = $region36
      $region35: #{tpu_custom_call.1} parent=5 // pred_region
        %s191 = ssub.s32 %s16, 1
        %s192 = sand.u32 %s29, 1
        %s193 = scalar_lea.sflag [#allocation3], %s192
        %s194 = sand.u32 %s29, 1
        %s195 = smul.addr %s194, 4
        %s196 = scalar_lea.vmem [#allocation2], %s195
        // Predicated region
        $region37: #{tpu_custom_call.1} parent=35 // pred_check
          %p197 = pneg %p42
        $region38: #{tpu_custom_call.1} parent=35 // pred_check_branch
          %199 = sbr.rel (%p197) target = $region40
        $region39: #{tpu_custom_call.1} parent=35 // pred_region
          %200 = dma.done %s193, 64
        $region40: #{tpu_custom_call.1} parent=35 // pred_fallthru
          _
        %s201 = sand.u32 %s29, 1
        %s202 = scalar_lea.sflag [#allocation3], %s201
        %s203 = sand.u32 %s29, 1
        %s204 = smul.addr %s203, 4
        %s205 = scalar_lea.vmem [#allocation2], %s204
        %p206 = pneg %p42
        %p207 = pneg %p39
        %p208 = scmp.lt.s32.totalorder %s21, 1
        %s209 = scalar_select %p208, %s21, 1
        %s210 = scalar_lea.vmem %s1, %s209
        %p211 = pneg %p68
        %p212 = pneg %p65
        %p213 = pneg %p89
        %p214 = pneg %p86
        %p215 = pneg %p110
        %p216 = pneg %p107
        %p217 = pneg %p136
        %p218 = pneg %p133
        %s219 = sand.u32 %s123, 1
        %s220 = scalar_lea.sflag [#allocation4], %s219
        %s221 = sand.u32 %s123, 1
        %s222 = smul.addr %s221, 4
        %s223 = scalar_lea.vmem [#allocation5], %s222
        %p224 = scmp.lt.s32.totalorder %s21, 1
        %s225 = scalar_select %p224, %s21, 1
        %s226 = scalar_lea.vmem %s1, %s225
        %v227 = vld [vmem:[%s2] sm:$0xf]
        %v228 = vld [vmem:[%s3] sm:$0xf]
        %v229 = vld [vmem:[%s196] sm:$0xf]
        %v230 = vld [vmem:[%s226] sm:$0x1]
        %v231 = vtanh.pop %v230
        %v232 = vmax.f32 %v231, 0.0
        %vm233 = vcmask 1040384
        %v234 = vsel %vm233, %v232, 0.0
        %235 = vadd.xlane.f32.xlu0 %v234
        %v236 = vpop.xlane.xlu0 %235
        %v237 = vmul.f32 %v232, %v236
        %v238 = vadd.f32 %v237, 1.0
        %v239 = vrsqrt.pop %v238
        %v240 = vmul.f32 %v239, %v239
        %v241 = vmul.f32 %v239, %v232
        %v243 = vlaneseq
        %v244 = vshrl.u32 %v243, 7
        %v245 = vsub.s32 0, %v244
        %v246 = vrot.slane %v232, %v245
        %v248 = vmul.f32 %v229, %v246
        %vm249 = vcmask 1043456
        %v250 = vsel %vm249, %v248, 0.0
        %251 = vadd.xlane.f32.xlu0 %v250
        %v252 = vpop.xlane.xlu0 %251
        %v254 = vlaneseq
        %v255 = vshrl.u32 %v254, 7
        %v256 = vsub.s32 0, %v255
        %v257 = vrot.slane %v241, %v256
        %v259 = vmul.f32 %v229, %v257
        %v260 = vsel %vm249, %v259, 0.0
        %261 = vadd.xlane.f32.xlu0 %v260
        %v262 = vpop.xlane.xlu0 %261
        %v264 = vlaneseq
        %v265 = vshrl.u32 %v264, 7
        %v266 = vsub.s32 0, %v265
        %v267 = vrot.slane %v240, %v266
        %v269 = vmul.f32 %v229, %v267
        %v271 = vrot.slane %v269, 4
        %v273 = vsel %vm249, %v229, %v271
        %vm274 = vcmask 31744
        %v276 = vsel %vm274, %v227, 0
        %v279 = vsel %vm249, %v252, 0
        %281 = vmatprep.subr.mxu0 0.0
        %282 = vmatpush1.msra.mxu0 %v279
        %283 = vmatprep.subr.mxu0 0.0
        %284 = vmatpush1.msra.mxu0 0.0
        %285 = vmatprep.subr.mxu0 0.0
        %286 = vmatpush1.msra.mxu0 0.0
        %287 = vmatprep.subr.mxu0 0.0
        %288 = vmatpush1.msra.mxu0 0.0
        %289 = vmatprep.subr.mxu0 0.0
        %290 = vmatpush1.msra.mxu0 0.0
        %291 = vmatprep.subr.mxu0 0.0
        %292 = vmatpush1.msra.mxu0 0.0
        %293 = vmatprep.subr.mxu0 0.0
        %294 = vmatpush1.msra.mxu0 0.0
        %295 = vmatprep.subr.mxu0 0.0
        %296 = vmatpush1.msra.mxu0 0.0
        %297 = vmatprep.subr.mxu0 0.0
        %298 = vmatpush1.msra.mxu0 0.0
        %299 = vmatprep.subr.mxu0 0.0
        %300 = vmatpush1.msra.mxu0 0.0
        %301 = vmatprep.subr.mxu0 0.0
        %302 = vmatpush1.msra.mxu0 0.0
        %303 = vmatprep.subr.mxu0 0.0
        %304 = vmatpush1.msra.mxu0 0.0
        %305 = vmatprep.subr.mxu0 0.0
        %306 = vmatpush1.msra.mxu0 0.0
        %307 = vmatprep.subr.mxu0 0.0
        %308 = vmatpush1.msra.mxu0 0.0
        %309 = vmatprep.subr.mxu0 0.0
        %310 = vmatpush1.msra.mxu0 0.0
        %311 = vmatprep.subr.mxu0 0.0
        %312 = vmatpush1.msra.mxu0 0.0
        %313 = vmatprep.subr.mxu0 0.0
        %314 = vmatpush1.msra.mxu0 0.0
        %315 = vmatprep.subr.mxu0 0.0
        %316 = vmatpush1.msra.mxu0 0.0
        %317 = vmatprep.subr.mxu0 0.0
        %318 = vmatpush1.msra.mxu0 0.0
        %319 = vmatprep.subr.mxu0 0.0
        %320 = vmatpush1.msra.mxu0 0.0
        %321 = vmatprep.subr.mxu0 0.0
        %322 = vmatpush1.msra.mxu0 0.0
        %323 = vmatprep.subr.mxu0 0.0
        %324 = vmatpush1.msra.mxu0 0.0
        %325 = vmatprep.subr.mxu0 0.0
        %326 = vmatpush1.msra.mxu0 0.0
        %327 = vmatprep.subr.mxu0 0.0
        %328 = vmatpush1.msra.mxu0 0.0
        %329 = vmatprep.subr.mxu0 0.0
        %330 = vmatpush1.msra.mxu0 0.0
        %331 = vmatprep.subr.mxu0 0.0
        %332 = vmatpush1.msra.mxu0 0.0
        %333 = vmatprep.subr.mxu0 0.0
        %334 = vmatpush1.msra.mxu0 0.0
        %335 = vmatprep.subr.mxu0 0.0
        %336 = vmatpush1.msra.mxu0 0.0
        %337 = vmatprep.subr.mxu0 0.0
        %338 = vmatpush1.msra.mxu0 0.0
        %339 = vmatprep.subr.mxu0 0.0
        %340 = vmatpush1.msra.mxu0 0.0
        %341 = vmatprep.subr.mxu0 0.0
        %342 = vmatpush1.msra.mxu0 0.0
        %343 = vmatprep.subr.mxu0 0.0
        %344 = vmatpush1.msra.mxu0 0.0
        %345 = vmatprep.mubr.f32.mxu0 0.0
        %346 = vmatmul.mubr.f32.gmra.mrb[0].mxu0 %v276
        %v347 = vpop.f32.mrb[0].mxu0
        %v348 = vadd.f32 0.0, %v347
        %v349 = vpop.f32.mrb[0].mxu0
        %350 = vdwg.mxu0
        %351 = vrot.lane.b32.xlu0 %v227, 124
        %v352 = vpop.permute.xlu0 %351
        %v353 = vsel %vm274, %v352, 0
        %v356 = vsel %vm249, %v262, 0
        %358 = vmatprep.subr.mxu0 0.0
        %359 = vmatpush1.msra.mxu0 %v356
        %360 = vmatprep.subr.mxu0 0.0
        %361 = vmatpush1.msra.mxu0 0.0
        %362 = vmatprep.subr.mxu0 0.0
        %363 = vmatpush1.msra.mxu0 0.0
        %364 = vmatprep.subr.mxu0 0.0
        %365 = vmatpush1.msra.mxu0 0.0
        %366 = vmatprep.subr.mxu0 0.0
        %367 = vmatpush1.msra.mxu0 0.0
        %368 = vmatprep.subr.mxu0 0.0
        %369 = vmatpush1.msra.mxu0 0.0
        %370 = vmatprep.subr.mxu0 0.0
        %371 = vmatpush1.msra.mxu0 0.0
        %372 = vmatprep.subr.mxu0 0.0
        %373 = vmatpush1.msra.mxu0 0.0
        %374 = vmatprep.subr.mxu0 0.0
        %375 = vmatpush1.msra.mxu0 0.0
        %376 = vmatprep.subr.mxu0 0.0
        %377 = vmatpush1.msra.mxu0 0.0
        %378 = vmatprep.subr.mxu0 0.0
        %379 = vmatpush1.msra.mxu0 0.0
        %380 = vmatprep.subr.mxu0 0.0
        %381 = vmatpush1.msra.mxu0 0.0
        %382 = vmatprep.subr.mxu0 0.0
        %383 = vmatpush1.msra.mxu0 0.0
        %384 = vmatprep.subr.mxu0 0.0
        %385 = vmatpush1.msra.mxu0 0.0
        %386 = vmatprep.subr.mxu0 0.0
        %387 = vmatpush1.msra.mxu0 0.0
        %388 = vmatprep.subr.mxu0 0.0
        %389 = vmatpush1.msra.mxu0 0.0
        %390 = vmatprep.subr.mxu0 0.0
        %391 = vmatpush1.msra.mxu0 0.0
        %392 = vmatprep.subr.mxu0 0.0
        %393 = vmatpush1.msra.mxu0 0.0
        %394 = vmatprep.subr.mxu0 0.0
        %395 = vmatpush1.msra.mxu0 0.0
        %396 = vmatprep.subr.mxu0 0.0
        %397 = vmatpush1.msra.mxu0 0.0
        %398 = vmatprep.subr.mxu0 0.0
        %399 = vmatpush1.msra.mxu0 0.0
        %400 = vmatprep.subr.mxu0 0.0
        %401 = vmatpush1.msra.mxu0 0.0
        %402 = vmatprep.subr.mxu0 0.0
        %403 = vmatpush1.msra.mxu0 0.0
        %404 = vmatprep.subr.mxu0 0.0
        %405 = vmatpush1.msra.mxu0 0.0
        %406 = vmatprep.subr.mxu0 0.0
        %407 = vmatpush1.msra.mxu0 0.0
        %408 = vmatprep.subr.mxu0 0.0
        %409 = vmatpush1.msra.mxu0 0.0
        %410 = vmatprep.subr.mxu0 0.0
        %411 = vmatpush1.msra.mxu0 0.0
        %412 = vmatprep.subr.mxu0 0.0
        %413 = vmatpush1.msra.mxu0 0.0
        %414 = vmatprep.subr.mxu0 0.0
        %415 = vmatpush1.msra.mxu0 0.0
        %416 = vmatprep.subr.mxu0 0.0
        %417 = vmatpush1.msra.mxu0 0.0
        %418 = vmatprep.subr.mxu0 0.0
        %419 = vmatpush1.msra.mxu0 0.0
        %420 = vmatprep.subr.mxu0 0.0
        %421 = vmatpush1.msra.mxu0 0.0
        %422 = vmatprep.mubr.f32.mxu0 0.0
        %423 = vmatmul.mubr.f32.gmra.mrb[0].mxu0 %v353
        %v424 = vpop.f32.mrb[0].mxu0
        %v425 = vadd.f32 0.0, %v424
        %v426 = vpop.f32.mrb[0].mxu0
        %427 = vdwg.mxu0
        %429 = vset.pattern.permute.xlu0 0
        %430 = vperm.xlu0 %429, %v348
        %v431 = vpop.permute.xlu0 %430
        %v433 = vmul.f32 %v431, %v246
        %vm434 = vcmask 64512
        %v435 = vsel %vm434, %v227, 0
        %437 = vmatprep.subr.mxu0 0.0
        %438 = vmatpush1.msra.mxu0 %v273
        %439 = vmatprep.subr.mxu0 0.0
        %440 = vmatpush1.msra.mxu0 0.0
        %441 = vmatprep.subr.mxu0 0.0
        %442 = vmatpush1.msra.mxu0 0.0
        %443 = vmatprep.subr.mxu0 0.0
        %444 = vmatpush1.msra.mxu0 0.0
        %445 = vmatprep.subr.mxu0 0.0
        %446 = vmatpush1.msra.mxu0 0.0
        %447 = vmatprep.subr.mxu0 0.0
        %448 = vmatpush1.msra.mxu0 0.0
        %449 = vmatprep.subr.mxu0 0.0
        %450 = vmatpush1.msra.mxu0 0.0
        %451 = vmatprep.subr.mxu0 0.0
        %452 = vmatpush1.msra.mxu0 0.0
        %453 = vmatprep.subr.mxu0 0.0
        %454 = vmatpush1.msra.mxu0 0.0
        %455 = vmatprep.subr.mxu0 0.0
        %456 = vmatpush1.msra.mxu0 0.0
        %457 = vmatprep.subr.mxu0 0.0
        %458 = vmatpush1.msra.mxu0 0.0
        %459 = vmatprep.subr.mxu0 0.0
        %460 = vmatpush1.msra.mxu0 0.0
        %461 = vmatprep.subr.mxu0 0.0
        %462 = vmatpush1.msra.mxu0 0.0
        %463 = vmatprep.subr.mxu0 0.0
        %464 = vmatpush1.msra.mxu0 0.0
        %465 = vmatprep.subr.mxu0 0.0
        %466 = vmatpush1.msra.mxu0 0.0
        %467 = vmatprep.subr.mxu0 0.0
        %468 = vmatpush1.msra.mxu0 0.0
        %469 = vmatprep.subr.mxu0 0.0
        %470 = vmatpush1.msra.mxu0 0.0
        %471 = vmatprep.subr.mxu0 0.0
        %472 = vmatpush1.msra.mxu0 0.0
        %473 = vmatprep.subr.mxu0 0.0
        %474 = vmatpush1.msra.mxu0 0.0
        %475 = vmatprep.subr.mxu0 0.0
        %476 = vmatpush1.msra.mxu0 0.0
        %477 = vmatprep.subr.mxu0 0.0
        %478 = vmatpush1.msra.mxu0 0.0
        %479 = vmatprep.subr.mxu0 0.0
        %480 = vmatpush1.msra.mxu0 0.0
        %481 = vmatprep.subr.mxu0 0.0
        %482 = vmatpush1.msra.mxu0 0.0
        %483 = vmatprep.subr.mxu0 0.0
        %484 = vmatpush1.msra.mxu0 0.0
        %485 = vmatprep.subr.mxu0 0.0
        %486 = vmatpush1.msra.mxu0 0.0
        %487 = vmatprep.subr.mxu0 0.0
        %488 = vmatpush1.msra.mxu0 0.0
        %489 = vmatprep.subr.mxu0 0.0
        %490 = vmatpush1.msra.mxu0 0.0
        %491 = vmatprep.subr.mxu0 0.0
        %492 = vmatpush1.msra.mxu0 0.0
        %493 = vmatprep.subr.mxu0 0.0
        %494 = vmatpush1.msra.mxu0 0.0
        %495 = vmatprep.subr.mxu0 0.0
        %496 = vmatpush1.msra.mxu0 0.0
        %497 = vmatprep.subr.mxu0 0.0
        %498 = vmatpush1.msra.mxu0 0.0
        %499 = vmatprep.subr.mxu0 0.0
        %500 = vmatpush1.msra.mxu0 0.0
        %501 = vmatprep.mubr.f32.mxu0 0.0
        %502 = vmatmul.mubr.f32.gmra.mrb[0].mxu0 %v435
        %v503 = vpop.f32.mrb[0].mxu0
        %v504 = vadd.f32 %v433, %v503
        %v505 = vpop.f32.mrb[0].mxu0
        %506 = vdwg.mxu0
        %508 = vset.pattern.permute.xlu0 0
        %509 = vperm.xlu0 %508, %v425
        %v510 = vpop.permute.xlu0 %509
        %v512 = vmul.f32 %v510, %v257
        %v513 = vadd.f32 %v504, %v512
        %515 = vset.pattern.permute.xlu0 0
        %516 = vperm.xlu0 %515, %v228
        %v517 = vpop.permute.xlu0 %516
        %v519 = vadd.f32 %v513, %v517
        %v520 = vmax.f32 %v519, 0.0
        %521 = vst [vmem:[%s223] sm:$0xf] %v520
        %s522 = sand.u32 %s123, 1
        %s523 = scalar_lea.sflag [#allocation4], %s522
        %s524 = sand.u32 %s123, 1
        %s525 = smul.addr %s524, 4
        %s526 = scalar_lea.vmem [#allocation5], %s525
        // Predicated region
        $region41: #{tpu_custom_call.1} parent=35 // pred_check
          %p527 = pneg %p133
        $region42: #{tpu_custom_call.1} parent=35 // pred_check_branch
          %529 = sbr.rel (%p527) target = $region44
        $region43: #{tpu_custom_call.1} parent=35 // pred_region
          %s531 = ssub.s32 64, 64
          %532 = vsyncadd %s523, %s531
          %s533 = smul.addr %s21, 64
          %s534 = scalar_lea.hbm %s4, %s533
          %s536 = sshll.u32 %s526, 4
          %s537 = int_to_ptr.vmem [resolvable:$true] %s536
          %539 = dma.vmem_to_hbm [thread:$0]  %s537, 64, %s534, %s523
        $region44: #{tpu_custom_call.1} parent=35 // pred_fallthru
          _
      $region36: #{tpu_custom_call.1} parent=5 // pred_fallthru
        _
      %p540 = scmp.le.s32.totalorder 2, %s16
      // Predicated region
      $region45: #{tpu_custom_call.1} parent=5 // pred_check
        %p541 = pneg %p540
      $region46: #{tpu_custom_call.1} parent=5 // pred_check_branch
        %543 = sbr.rel (%p541) target = $region48
      $region47: #{tpu_custom_call.1} parent=5 // pred_region
        %s544 = ssub.s32 %s16, 2
        // Predicated region
        $region49: #{tpu_custom_call.1} parent=47 // pred_check
          %p545 = pneg %p139
        $region50: #{tpu_custom_call.1} parent=47 // pred_check_branch
          %547 = sbr.rel (%p545) target = $region52
        $region51: #{tpu_custom_call.1} parent=47 // pred_region
          %s548 = sand.u32 %s124, 1
          %s549 = scalar_lea.sflag [#allocation4], %s548
          %s550 = sand.u32 %s124, 1
          %s551 = smul.addr %s550, 4
          %s552 = scalar_lea.vmem [#allocation5], %s551
          %553 = dma.done %s549, 64
        $region52: #{tpu_custom_call.1} parent=47 // pred_fallthru
          _
      $region48: #{tpu_custom_call.1} parent=5 // pred_fallthru
        _
    $region6: #{tpu_custom_call.1} parent=1 // loop_footer
      %s20 = sadd.s32 1, %s16
    $region7: #{tpu_custom_call.1} parent=1 // loop_footer_branch
      %15 = sbr.rel target = $region3
    $region8: #{tpu_custom_call.1} parent=1 // loop_exit
      _
    %554 = vsyncpa [#allocation3], 1
    %s555 = scalar_lea.sflag [#allocation3], 1
    %556 = vsyncpa %s555, 1
    %557 = vsyncpa [#allocation4], 1
    %s558 = scalar_lea.sflag [#allocation4], 1
    %559 = vsyncpa %s558, 1

</llo_original>
